<compile_context>
chip_gen: v5e
topology: v5e:2x2
jax: 0.10.0
libtpu: 0.0.40
codegen_flags: <defaults>
</compile_context>

<pallas_src>
import jax
import jax.numpy as jnp
from jax import lax
from jax.experimental import pallas as pl
from jax.experimental.pallas import tpu as pltpu


def _cdiv(a, b):
    return -(-a // b)


# ----------------------------------------------------------------------------
# Hardware-aware configuration
# ----------------------------------------------------------------------------
def _tpu_config():
    """Return (block_budget_bytes, vmem_ceiling_bytes, small_c_threshold, min_grid_steps)."""
    vmem = 128 << 20
    try:
        info = pltpu.get_tpu_info()
        v = getattr(info, "vmem_capacity_bytes", None)
        if v:
            vmem = int(v)
    except Exception:
        pass
    small_vmem = vmem <= (64 << 20)            # v7x-like: 64 MiB per TC, 2 TCs/chip
    block_budget = (4 << 20) if small_vmem else (8 << 20)
    vmem_ceiling = max(32 << 20, (vmem * 3) // 4)
    small_c_threshold = 12 if small_vmem else 16
    min_grid_steps = 2 if small_vmem else 1    # keep both v7x TensorCores busy
    return block_budget, vmem_ceiling, small_c_threshold, min_grid_steps


# ----------------------------------------------------------------------------
# Tiling plan (pixels are counted in "units" of 128 lanes)
# ----------------------------------------------------------------------------
def _plan_tiles(N, C, P, itemsize, block_budget, min_steps, unit_gran, allow_batch_merge):
    """Return (p_pad, tp_units, nb).

    p_pad     : padded pixel count (multiple of 128, and of 128*tp_units).
    tp_units  : pixel-tile size in 128-pixel units; multiple of `unit_gran`
                or equal to the full (padded) pixel extent.
    nb        : batch elements per block (divides N).
    """
    bytes_per_unit = C * 128 * itemsize
    units_budget = max(unit_gran, (block_budget // bytes_per_unit) // unit_gran * unit_gran)
    p_units = _cdiv(P, 128)

    if p_units <= units_budget:
        tp = p_units
        # Single-image inputs on dual-TC parts: split the pixel axis so both
        # TensorCores get a block (only when it needs little extra padding).
        if min_steps >= 2 and N == 1 and p_units >= 2 * unit_gran:
            tp = _cdiv(_cdiv(p_units, 2), unit_gran) * unit_gran
    else:
        tp = units_budget

    if tp >= p_units:
        tp = p_units
        p_units_pad = p_units
    else:
        tp = max(unit_gran, (tp // unit_gran) * unit_gran)
        p_units_pad = _cdiv(p_units, tp) * tp

    nb = 1
    if allow_batch_merge and N > 1 and p_units_pad == tp:
        # Tiny per-image blocks: merge batch elements into one fatter step,
        # but keep >= min_steps grid steps.
        max_nb = max(1, units_budget // max(tp, 1))
        for cand in range(min(N, max_nb), 0, -1):
            if N % cand == 0 and (N // cand) >= min_steps:
                nb = cand
                break

    return p_units_pad * 128, tp, nb


def _pick_slab(tp_sub, C):
    """Sublane rows processed per inner-loop step (bounds live vregs to ~40)."""
    if tp_sub % 8 != 0:
        return tp_sub                       # tp_sub == full pixel extent; single slab
    slab = max(8, min(64, 8 * (40 // (C + 1))))
    slab = min(slab, tp_sub)
    while tp_sub % slab:
        slab -= 8
    return slab


# ----------------------------------------------------------------------------
# Kernels
# ----------------------------------------------------------------------------
def _make_small_c_kernel(C, nb, tp_sub, slab):
    """Channel mix via VPU FMAs with scalar weights from SMEM (small C).

    x_ref / o_ref : VMEM (nb, C, tp_sub, 128) -- sublane- and lane-dense slabs.
    w_ref         : SMEM (C, C) f32 folded weight.
    b_ref         : SMEM (C,)   f32 folded bias.
    """
    n_slabs = tp_sub // slab

    def kernel(w_ref, b_ref, x_ref, o_ref):
        # Hoist the C*C + C SMEM scalar reads out of the pixel loops.
        w = [[w_ref[o, c] for c in range(C)] for o in range(C)]
        b = [b_ref[o] for o in range(C)]

        def do_slab(n, s0):
            # Load all C input-channel slabs once, then produce all C outputs.
            xs = [x_ref[n, c, pl.ds(s0, slab), :].astype(jnp.float32) for c in range(C)]
            for o in range(C):
                acc = xs[0] * w[o][0] + b[o]
                for c in range(1, C):
                    acc = acc + xs[c] * w[o][c]
                o_ref[n, o, pl.ds(s0, slab), :] = acc.astype(o_ref.dtype)

        for n in range(nb):
            if n_slabs <= 8:
                for s in range(n_slabs):
                    do_slab(n, s * slab)
            else:
                def body(s, carry, n=n):
                    do_slab(n, pl.multiple_of(s * slab, slab))
                    return carry
                lax.fori_loop(0, n_slabs, body, 0)

    return kernel


def _mxu_kernel(w_ref, b_ref, x_ref, o_ref):
    """Channel mix via a single MXU matmul (lane-sized C).

    w_ref: VMEM (C, C) f32 folded weight; b_ref: VMEM (C, 1) f32 folded bias.
    x_ref, o_ref: VMEM (C, TILE_P); batch dim squeezed by the BlockSpec.
    """
    y = jnp.dot(w_ref[...], x_ref[...].astype(jnp.float32),
                preferred_element_type=jnp.float32)
    o_ref[...] = (y + b_ref[...]).astype(o_ref.dtype)


# ----------------------------------------------------------------------------
# Wrapper
# ----------------------------------------------------------------------------
def prescaled_additive_residual(x_nchw, alpha, weight, bias, *,
                                target_block_bytes=None,
                                small_c_threshold=None):
    """x_nchw: (N, C, H, W). alpha: scalar. weight: (C, C) 1x1-conv. bias: (C,)."""
    N, C, H, W = x_nchw.shape
    weight = jnp.asarray(weight)
    bias = jnp.asarray(bias)
    assert weight.shape == (C, C) and bias.shape == (C,)
    P = H * W
    itemsize = jnp.dtype(x_nchw.dtype).itemsize

    block_budget, vmem_ceiling, auto_thresh, min_steps = _tpu_config()
    if target_block_bytes is None:
        target_block_bytes = block_budget
    if small_c_threshold is None:
        small_c_threshold = auto_thresh

    # Fold alpha / Lipschitz constant / identity into one affine channel mix.
    alpha = jnp.asarray(alpha, jnp.float32)
    inv_lip = 1.0 / (1.0 + jnp.abs(alpha))
    w_full = (alpha * weight.astype(jnp.float32)
              + jnp.eye(C, dtype=jnp.float32)) * inv_lip              # (C, C)
    b_full = bias.astype(jnp.float32) * inv_lip                       # (C,)

    x3 = x_nchw.reshape(N, C, P)                                      # metadata-only
    small_c = C <= small_c_threshold

    if small_c:
        # ------------------- sublane-dense VPU path -------------------
        p_pad, tp_sub, nb = _plan_tiles(N, C, P, itemsize, target_block_bytes,
                                        min_steps, unit_gran=8, allow_batch_merge=True)
        if p_pad != P:
            x3 = jnp.pad(x3, ((0, 0), (0, 0), (0, p_pad - P)))
        p_sub = p_pad // 128
        x_in = x3.reshape(N, C, p_sub, 128)                           # metadata-only

        slab = _pick_slab(tp_sub, C)
        kernel = _make_small_c_kernel(C, nb, tp_sub, slab)
        grid = (N // nb, p_sub // tp_sub)
        blk = (nb, C, tp_sub, 128)
        x_spec = pl.BlockSpec(blk, lambda bi, pi: (bi, 0, pi, 0))
        o_spec = pl.BlockSpec(blk, lambda bi, pi: (bi, 0, pi, 0))
        w_spec = pl.BlockSpec(memory_space=pltpu.SMEM)                # scalar weights
        b_spec = pl.BlockSpec(memory_space=pltpu.SMEM)
        w_arg, b_arg = w_full, b_full
        out_shape = jax.ShapeDtypeStruct((N, C, p_sub, 128), x3.dtype)
        block_bytes = nb * C * tp_sub * 128 * itemsize
        param_resident = 0                                            # params in SMEM
    else:
        # ------------------- MXU path (lane-sized C) -------------------
        # Account for the double-buffered (C, C) f32 weight residency.
        w_resident = 2 * (C * C + C) * 4
        avail_per_buf = (vmem_ceiling - w_resident - (4 << 20)) // 4
        mxu_budget = max(C * 128 * itemsize, min(target_block_bytes, avail_per_buf))
        # TODO(synk): for C large enough that 2x the f32 weight no longer fits VMEM
        #             (C >= ~4096 on 64-MiB parts), tile the output-channel dim with
        #             an extra grid axis instead of keeping the full weight resident.
        p_pad, tp_units, nb = _plan_tiles(N, C, P, itemsize, mxu_budget,
                                          min_steps, unit_gran=1, allow_batch_merge=False)
        tile_p = tp_units * 128
        if p_pad != P:
            x3 = jnp.pad(x3, ((0, 0), (0, 0), (0, p_pad - P)))
        x_in = x3

        kernel = _mxu_kernel
        grid = (N, p_pad // tile_p)
        x_spec = pl.BlockSpec((None, C, tile_p), lambda n, p: (n, 0, p))
        o_spec = pl.BlockSpec((None, C, tile_p), lambda n, p: (n, 0, p))
        w_spec = pl.BlockSpec((C, C), lambda n, p: (0, 0))            # resident weight
        b_spec = pl.BlockSpec((C, 1), lambda n, p: (0, 0))
        w_arg, b_arg = w_full, b_full.reshape(C, 1)
        out_shape = jax.ShapeDtypeStruct((N, C, p_pad), x3.dtype)
        block_bytes = C * tile_p * itemsize
        param_resident = w_resident

    # VMEM budget: double-buffered in + out blocks, resident params, headroom.
    vmem_need = 4 * block_bytes + param_resident + (2 << 20)
    vmem_limit = int(min(max(vmem_need, 32 << 20), vmem_ceiling))

    cost = pl.CostEstimate(
        flops=2 * N * p_pad * C * C,
        transcendentals=0,
        bytes_accessed=2 * N * C * p_pad * itemsize + (C * C + C) * 4,
    )

    out = pl.pallas_call(
        kernel,
        out_shape=out_shape,
        grid=grid,
        in_specs=[w_spec, b_spec, x_spec],
        out_specs=o_spec,
        compiler_params=pltpu.CompilerParams(
            dimension_semantics=("parallel", "parallel"),
            vmem_limit_bytes=vmem_limit,
        ),
        cost_estimate=cost,
    )(w_arg, b_arg, x_in)

    out = out.reshape(N, C, p_pad)[:, :, :P].reshape(N, C, H, W)
    return out


# ----------------------------------------------------------------------------
# Pure-JAX reference mirroring the PyTorch forward exactly.
# ----------------------------------------------------------------------------
def _reference(x_nchw, alpha, weight, bias):
    xs = x_nchw * alpha
    out = jnp.einsum("nchw,oc->nohw", xs, weight,
                     precision=jax.lax.Precision.HIGHEST) + bias[None, :, None, None]
    lip = 1.0 + jnp.abs(alpha)
    return x_nchw / lip + (1.0 / lip) * out


if __name__ == "__main__":
    key = jax.random.PRNGKey(0)
    ks = jax.random.split(key, 12)

    def run_case(idx, N, C, H, W, alpha_val, tol):
        kx, kw, kb = ks[3 * idx], ks[3 * idx + 1], ks[3 * idx + 2]
        x = jax.random.normal(kx, (N, C, H, W), dtype=jnp.float32)
        w = jax.random.normal(kw, (C, C), dtype=jnp.float32) * 0.1
        b = jax.random.normal(kb, (C,), dtype=jnp.float32) * 0.1
        a = jnp.float32(alpha_val)
        y = jax.block_until_ready(prescaled_additive_residual(x, a, w, b))
        y_ref = _reference(x, a, w, b)
        assert y.shape == x.shape, f"shape mismatch in case {idx}"
        assert jnp.allclose(y, y_ref, atol=tol, rtol=tol), f"value mismatch in case {idx}"

    # Case 1: module-scale shapes (C=4) -> sublane-dense VPU/SMEM channel-mix path.
    run_case(0, 2, 4, 16, 16, 1.0, 1e-5)
    # Case 2: lane-sized channel count -> MXU path (+ pixel padding 64->128, alpha<0).
    run_case(1, 2, 128, 8, 8, -0.5, 1e-4)
    # Case 3: non-128-multiple spatial size -> host pad + slice on the small-C path.
    run_case(2, 1, 3, 10, 10, 0.7, 1e-5)
    # Case 4: larger spatial map -> multi-slab small-C path (>=2-step grid on v7x).
    run_case(3, 1, 4, 96, 96, -1.3, 1e-5)

    print("KERNEL_OK")
</pallas_src>

<mosaic_0001>
module attributes {stable_mosaic.version = 11 : i64} {
  func.func @kernel(%arg0: i32, %arg1: i32, %arg2: memref<4x4xf32, #tpu.memory_space<smem>>, %arg3: memref<4xf32, #tpu.memory_space<smem>>, %arg4: memref<2x4x2x128xf32, #tpu.memory_space<vmem>>, %arg5: memref<2x4x2x128xf32, #tpu.memory_space<vmem>>) attributes {dimension_semantics = [#tpu.dimension_semantics<parallel>, #tpu.dimension_semantics<parallel>], iteration_bounds = array<i64: 1, 1>, scalar_prefetch = 0 : i64, scratch_operands = 0 : i64, tpu.core_type = #tpu.core_type<tc>, window_params = [{transform_indices = @transform_0, window_bounds = array<i64: 4, 4>}, {transform_indices = @transform_1, window_bounds = array<i64: 4>}, {transform_indices = @transform_2, window_bounds = array<i64: 2, 4, 2, 128>}, {transform_indices = @transform_3, window_bounds = array<i64: 2, 4, 2, 128>}]} {
    %c0 = arith.constant 0 : index
    %c0_0 = arith.constant 0 : index
    %0 = memref.load %arg2[%c0, %c0_0] : memref<4x4xf32, #tpu.memory_space<smem>>
    %c0_1 = arith.constant 0 : index
    %c1 = arith.constant 1 : index
    %1 = memref.load %arg2[%c0_1, %c1] : memref<4x4xf32, #tpu.memory_space<smem>>
    %c0_2 = arith.constant 0 : index
    %c2 = arith.constant 2 : index
    %2 = memref.load %arg2[%c0_2, %c2] : memref<4x4xf32, #tpu.memory_space<smem>>
    %c0_3 = arith.constant 0 : index
    %c3 = arith.constant 3 : index
    %3 = memref.load %arg2[%c0_3, %c3] : memref<4x4xf32, #tpu.memory_space<smem>>
    %c1_4 = arith.constant 1 : index
    %c0_5 = arith.constant 0 : index
    %4 = memref.load %arg2[%c1_4, %c0_5] : memref<4x4xf32, #tpu.memory_space<smem>>
    %c1_6 = arith.constant 1 : index
    %c1_7 = arith.constant 1 : index
    %5 = memref.load %arg2[%c1_6, %c1_7] : memref<4x4xf32, #tpu.memory_space<smem>>
    %c1_8 = arith.constant 1 : index
    %c2_9 = arith.constant 2 : index
    %6 = memref.load %arg2[%c1_8, %c2_9] : memref<4x4xf32, #tpu.memory_space<smem>>
    %c1_10 = arith.constant 1 : index
    %c3_11 = arith.constant 3 : index
    %7 = memref.load %arg2[%c1_10, %c3_11] : memref<4x4xf32, #tpu.memory_space<smem>>
    %c2_12 = arith.constant 2 : index
    %c0_13 = arith.constant 0 : index
    %8 = memref.load %arg2[%c2_12, %c0_13] : memref<4x4xf32, #tpu.memory_space<smem>>
    %c2_14 = arith.constant 2 : index
    %c1_15 = arith.constant 1 : index
    %9 = memref.load %arg2[%c2_14, %c1_15] : memref<4x4xf32, #tpu.memory_space<smem>>
    %c2_16 = arith.constant 2 : index
    %c2_17 = arith.constant 2 : index
    %10 = memref.load %arg2[%c2_16, %c2_17] : memref<4x4xf32, #tpu.memory_space<smem>>
    %c2_18 = arith.constant 2 : index
    %c3_19 = arith.constant 3 : index
    %11 = memref.load %arg2[%c2_18, %c3_19] : memref<4x4xf32, #tpu.memory_space<smem>>
    %c3_20 = arith.constant 3 : index
    %c0_21 = arith.constant 0 : index
    %12 = memref.load %arg2[%c3_20, %c0_21] : memref<4x4xf32, #tpu.memory_space<smem>>
    %c3_22 = arith.constant 3 : index
    %c1_23 = arith.constant 1 : index
    %13 = memref.load %arg2[%c3_22, %c1_23] : memref<4x4xf32, #tpu.memory_space<smem>>
    %c3_24 = arith.constant 3 : index
    %c2_25 = arith.constant 2 : index
    %14 = memref.load %arg2[%c3_24, %c2_25] : memref<4x4xf32, #tpu.memory_space<smem>>
    %c3_26 = arith.constant 3 : index
    %c3_27 = arith.constant 3 : index
    %15 = memref.load %arg2[%c3_26, %c3_27] : memref<4x4xf32, #tpu.memory_space<smem>>
    %c0_28 = arith.constant 0 : index
    %16 = memref.load %arg3[%c0_28] : memref<4xf32, #tpu.memory_space<smem>>
    %c1_29 = arith.constant 1 : index
    %17 = memref.load %arg3[%c1_29] : memref<4xf32, #tpu.memory_space<smem>>
    %c2_30 = arith.constant 2 : index
    %18 = memref.load %arg3[%c2_30] : memref<4xf32, #tpu.memory_space<smem>>
    %c3_31 = arith.constant 3 : index
    %19 = memref.load %arg3[%c3_31] : memref<4xf32, #tpu.memory_space<smem>>
    %c0_32 = arith.constant 0 : index
    %c0_33 = arith.constant 0 : index
    %c0_34 = arith.constant 0 : index
    %c0_35 = arith.constant 0 : index
    %20 = vector.load %arg4[%c0_32, %c0_33, %c0_34, %c0_35] : memref<2x4x2x128xf32, #tpu.memory_space<vmem>>, vector<1x1x2x128xf32>
    %21 = vector.shape_cast %20 : vector<1x1x2x128xf32> to vector<2x128xf32>
    %c0_36 = arith.constant 0 : index
    %c1_37 = arith.constant 1 : index
    %c0_38 = arith.constant 0 : index
    %c0_39 = arith.constant 0 : index
    %22 = vector.load %arg4[%c0_36, %c1_37, %c0_38, %c0_39] : memref<2x4x2x128xf32, #tpu.memory_space<vmem>>, vector<1x1x2x128xf32>
    %23 = vector.shape_cast %22 : vector<1x1x2x128xf32> to vector<2x128xf32>
    %c0_40 = arith.constant 0 : index
    %c2_41 = arith.constant 2 : index
    %c0_42 = arith.constant 0 : index
    %c0_43 = arith.constant 0 : index
    %24 = vector.load %arg4[%c0_40, %c2_41, %c0_42, %c0_43] : memref<2x4x2x128xf32, #tpu.memory_space<vmem>>, vector<1x1x2x128xf32>
    %25 = vector.shape_cast %24 : vector<1x1x2x128xf32> to vector<2x128xf32>
    %c0_44 = arith.constant 0 : index
    %c3_45 = arith.constant 3 : index
    %c0_46 = arith.constant 0 : index
    %c0_47 = arith.constant 0 : index
    %26 = vector.load %arg4[%c0_44, %c3_45, %c0_46, %c0_47] : memref<2x4x2x128xf32, #tpu.memory_space<vmem>>, vector<1x1x2x128xf32>
    %27 = vector.shape_cast %26 : vector<1x1x2x128xf32> to vector<2x128xf32>
    %28 = vector.broadcast %0 : f32 to vector<2x128xf32>
    %29 = arith.mulf %21, %28 : vector<2x128xf32>
    %30 = vector.broadcast %16 : f32 to vector<2x128xf32>
    %31 = arith.addf %29, %30 : vector<2x128xf32>
    %32 = vector.broadcast %1 : f32 to vector<2x128xf32>
    %33 = arith.mulf %23, %32 : vector<2x128xf32>
    %34 = arith.addf %31, %33 : vector<2x128xf32>
    %35 = vector.broadcast %2 : f32 to vector<2x128xf32>
    %36 = arith.mulf %25, %35 : vector<2x128xf32>
    %37 = arith.addf %34, %36 : vector<2x128xf32>
    %38 = vector.broadcast %3 : f32 to vector<2x128xf32>
    %39 = arith.mulf %27, %38 : vector<2x128xf32>
    %40 = arith.addf %37, %39 : vector<2x128xf32>
    %c0_48 = arith.constant 0 : index
    %c0_49 = arith.constant 0 : index
    %c0_50 = arith.constant 0 : index
    %c0_51 = arith.constant 0 : index
    %41 = vector.load %arg5[%c0_48, %c0_49, %c0_50, %c0_51] : memref<2x4x2x128xf32, #tpu.memory_space<vmem>>, vector<1x1x2x128xf32>
    %42 = vector.shape_cast %41 : vector<1x1x2x128xf32> to vector<2x128xf32>
    %43 = vector.shape_cast %40 : vector<2x128xf32> to vector<1x1x2x128xf32>
    tpu.vector_store %arg5[%c0_48, %c0_49, %c0_50, %c0_51], %43 {strides = array<i32>} : memref<2x4x2x128xf32, #tpu.memory_space<vmem>>, vector<1x1x2x128xf32>,
    %44 = vector.broadcast %4 : f32 to vector<2x128xf32>
    %45 = arith.mulf %21, %44 : vector<2x128xf32>
    %46 = vector.broadcast %17 : f32 to vector<2x128xf32>
    %47 = arith.addf %45, %46 : vector<2x128xf32>
    %48 = vector.broadcast %5 : f32 to vector<2x128xf32>
    %49 = arith.mulf %23, %48 : vector<2x128xf32>
    %50 = arith.addf %47, %49 : vector<2x128xf32>
    %51 = vector.broadcast %6 : f32 to vector<2x128xf32>
    %52 = arith.mulf %25, %51 : vector<2x128xf32>
    %53 = arith.addf %50, %52 : vector<2x128xf32>
    %54 = vector.broadcast %7 : f32 to vector<2x128xf32>
    %55 = arith.mulf %27, %54 : vector<2x128xf32>
    %56 = arith.addf %53, %55 : vector<2x128xf32>
    %c0_52 = arith.constant 0 : index
    %c1_53 = arith.constant 1 : index
    %c0_54 = arith.constant 0 : index
    %c0_55 = arith.constant 0 : index
    %57 = vector.load %arg5[%c0_52, %c1_53, %c0_54, %c0_55] : memref<2x4x2x128xf32, #tpu.memory_space<vmem>>, vector<1x1x2x128xf32>
    %58 = vector.shape_cast %57 : vector<1x1x2x128xf32> to vector<2x128xf32>
    %59 = vector.shape_cast %56 : vector<2x128xf32> to vector<1x1x2x128xf32>
    tpu.vector_store %arg5[%c0_52, %c1_53, %c0_54, %c0_55], %59 {strides = array<i32>} : memref<2x4x2x128xf32, #tpu.memory_space<vmem>>, vector<1x1x2x128xf32>,
    %60 = vector.broadcast %8 : f32 to vector<2x128xf32>
    %61 = arith.mulf %21, %60 : vector<2x128xf32>
    %62 = vector.broadcast %18 : f32 to vector<2x128xf32>
    %63 = arith.addf %61, %62 : vector<2x128xf32>
    %64 = vector.broadcast %9 : f32 to vector<2x128xf32>
    %65 = arith.mulf %23, %64 : vector<2x128xf32>
    %66 = arith.addf %63, %65 : vector<2x128xf32>
    %67 = vector.broadcast %10 : f32 to vector<2x128xf32>
    %68 = arith.mulf %25, %67 : vector<2x128xf32>
    %69 = arith.addf %66, %68 : vector<2x128xf32>
    %70 = vector.broadcast %11 : f32 to vector<2x128xf32>
    %71 = arith.mulf %27, %70 : vector<2x128xf32>
    %72 = arith.addf %69, %71 : vector<2x128xf32>
    %c0_56 = arith.constant 0 : index
    %c2_57 = arith.constant 2 : index
    %c0_58 = arith.constant 0 : index
    %c0_59 = arith.constant 0 : index
    %73 = vector.load %arg5[%c0_56, %c2_57, %c0_58, %c0_59] : memref<2x4x2x128xf32, #tpu.memory_space<vmem>>, vector<1x1x2x128xf32>
    %74 = vector.shape_cast %73 : vector<1x1x2x128xf32> to vector<2x128xf32>
    %75 = vector.shape_cast %72 : vector<2x128xf32> to vector<1x1x2x128xf32>
    tpu.vector_store %arg5[%c0_56, %c2_57, %c0_58, %c0_59], %75 {strides = array<i32>} : memref<2x4x2x128xf32, #tpu.memory_space<vmem>>, vector<1x1x2x128xf32>,
    %76 = vector.broadcast %12 : f32 to vector<2x128xf32>
    %77 = arith.mulf %21, %76 : vector<2x128xf32>
    %78 = vector.broadcast %19 : f32 to vector<2x128xf32>
    %79 = arith.addf %77, %78 : vector<2x128xf32>
    %80 = vector.broadcast %13 : f32 to vector<2x128xf32>
    %81 = arith.mulf %23, %80 : vector<2x128xf32>
    %82 = arith.addf %79, %81 : vector<2x128xf32>
    %83 = vector.broadcast %14 : f32 to vector<2x128xf32>
    %84 = arith.mulf %25, %83 : vector<2x128xf32>
    %85 = arith.addf %82, %84 : vector<2x128xf32>
    %86 = vector.broadcast %15 : f32 to vector<2x128xf32>
    %87 = arith.mulf %27, %86 : vector<2x128xf32>
    %88 = arith.addf %85, %87 : vector<2x128xf32>
    %c0_60 = arith.constant 0 : index
    %c3_61 = arith.constant 3 : index
    %c0_62 = arith.constant 0 : index
    %c0_63 = arith.constant 0 : index
    %89 = vector.load %arg5[%c0_60, %c3_61, %c0_62, %c0_63] : memref<2x4x2x128xf32, #tpu.memory_space<vmem>>, vector<1x1x2x128xf32>
    %90 = vector.shape_cast %89 : vector<1x1x2x128xf32> to vector<2x128xf32>
    %91 = vector.shape_cast %88 : vector<2x128xf32> to vector<1x1x2x128xf32>
    tpu.vector_store %arg5[%c0_60, %c3_61, %c0_62, %c0_63], %91 {strides = array<i32>} : memref<2x4x2x128xf32, #tpu.memory_space<vmem>>, vector<1x1x2x128xf32>,
    %c1_64 = arith.constant 1 : index
    %c0_65 = arith.constant 0 : index
    %c0_66 = arith.constant 0 : index
    %c0_67 = arith.constant 0 : index
    %92 = vector.load %arg4[%c1_64, %c0_65, %c0_66, %c0_67] : memref<2x4x2x128xf32, #tpu.memory_space<vmem>>, vector<1x1x2x128xf32>
    %93 = vector.shape_cast %92 : vector<1x1x2x128xf32> to vector<2x128xf32>
    %c1_68 = arith.constant 1 : index
    %c1_69 = arith.constant 1 : index
    %c0_70 = arith.constant 0 : index
    %c0_71 = arith.constant 0 : index
    %94 = vector.load %arg4[%c1_68, %c1_69, %c0_70, %c0_71] : memref<2x4x2x128xf32, #tpu.memory_space<vmem>>, vector<1x1x2x128xf32>
    %95 = vector.shape_cast %94 : vector<1x1x2x128xf32> to vector<2x128xf32>
    %c1_72 = arith.constant 1 : index
    %c2_73 = arith.constant 2 : index
    %c0_74 = arith.constant 0 : index
    %c0_75 = arith.constant 0 : index
    %96 = vector.load %arg4[%c1_72, %c2_73, %c0_74, %c0_75] : memref<2x4x2x128xf32, #tpu.memory_space<vmem>>, vector<1x1x2x128xf32>
    %97 = vector.shape_cast %96 : vector<1x1x2x128xf32> to vector<2x128xf32>
    %c1_76 = arith.constant 1 : index
    %c3_77 = arith.constant 3 : index
    %c0_78 = arith.constant 0 : index
    %c0_79 = arith.constant 0 : index
    %98 = vector.load %arg4[%c1_76, %c3_77, %c0_78, %c0_79] : memref<2x4x2x128xf32, #tpu.memory_space<vmem>>, vector<1x1x2x128xf32>
    %99 = vector.shape_cast %98 : vector<1x1x2x128xf32> to vector<2x128xf32>
    %100 = vector.broadcast %0 : f32 to vector<2x128xf32>
    %101 = arith.mulf %93, %100 : vector<2x128xf32>
    %102 = vector.broadcast %16 : f32 to vector<2x128xf32>
    %103 = arith.addf %101, %102 : vector<2x128xf32>
    %104 = vector.broadcast %1 : f32 to vector<2x128xf32>
    %105 = arith.mulf %95, %104 : vector<2x128xf32>
    %106 = arith.addf %103, %105 : vector<2x128xf32>
    %107 = vector.broadcast %2 : f32 to vector<2x128xf32>
    %108 = arith.mulf %97, %107 : vector<2x128xf32>
    %109 = arith.addf %106, %108 : vector<2x128xf32>
    %110 = vector.broadcast %3 : f32 to vector<2x128xf32>
    %111 = arith.mulf %99, %110 : vector<2x128xf32>
    %112 = arith.addf %109, %111 : vector<2x128xf32>
    %c1_80 = arith.constant 1 : index
    %c0_81 = arith.constant 0 : index
    %c0_82 = arith.constant 0 : index
    %c0_83 = arith.constant 0 : index
    %113 = vector.load %arg5[%c1_80, %c0_81, %c0_82, %c0_83] : memref<2x4x2x128xf32, #tpu.memory_space<vmem>>, vector<1x1x2x128xf32>
    %114 = vector.shape_cast %113 : vector<1x1x2x128xf32> to vector<2x128xf32>
    %115 = vector.shape_cast %112 : vector<2x128xf32> to vector<1x1x2x128xf32>
    tpu.vector_store %arg5[%c1_80, %c0_81, %c0_82, %c0_83], %115 {strides = array<i32>} : memref<2x4x2x128xf32, #tpu.memory_space<vmem>>, vector<1x1x2x128xf32>,
    %116 = vector.broadcast %4 : f32 to vector<2x128xf32>
    %117 = arith.mulf %93, %116 : vector<2x128xf32>
    %118 = vector.broadcast %17 : f32 to vector<2x128xf32>
    %119 = arith.addf %117, %118 : vector<2x128xf32>
    %120 = vector.broadcast %5 : f32 to vector<2x128xf32>
    %121 = arith.mulf %95, %120 : vector<2x128xf32>
    %122 = arith.addf %119, %121 : vector<2x128xf32>
    %123 = vector.broadcast %6 : f32 to vector<2x128xf32>
    %124 = arith.mulf %97, %123 : vector<2x128xf32>
    %125 = arith.addf %122, %124 : vector<2x128xf32>
    %126 = vector.broadcast %7 : f32 to vector<2x128xf32>
    %127 = arith.mulf %99, %126 : vector<2x128xf32>
    %128 = arith.addf %125, %127 : vector<2x128xf32>
    %c1_84 = arith.constant 1 : index
    %c1_85 = arith.constant 1 : index
    %c0_86 = arith.constant 0 : index
    %c0_87 = arith.constant 0 : index
    %129 = vector.load %arg5[%c1_84, %c1_85, %c0_86, %c0_87] : memref<2x4x2x128xf32, #tpu.memory_space<vmem>>, vector<1x1x2x128xf32>
    %130 = vector.shape_cast %129 : vector<1x1x2x128xf32> to vector<2x128xf32>
    %131 = vector.shape_cast %128 : vector<2x128xf32> to vector<1x1x2x128xf32>
    tpu.vector_store %arg5[%c1_84, %c1_85, %c0_86, %c0_87], %131 {strides = array<i32>} : memref<2x4x2x128xf32, #tpu.memory_space<vmem>>, vector<1x1x2x128xf32>,
    %132 = vector.broadcast %8 : f32 to vector<2x128xf32>
    %133 = arith.mulf %93, %132 : vector<2x128xf32>
    %134 = vector.broadcast %18 : f32 to vector<2x128xf32>
    %135 = arith.addf %133, %134 : vector<2x128xf32>
    %136 = vector.broadcast %9 : f32 to vector<2x128xf32>
    %137 = arith.mulf %95, %136 : vector<2x128xf32>
    %138 = arith.addf %135, %137 : vector<2x128xf32>
    %139 = vector.broadcast %10 : f32 to vector<2x128xf32>
    %140 = arith.mulf %97, %139 : vector<2x128xf32>
    %141 = arith.addf %138, %140 : vector<2x128xf32>
    %142 = vector.broadcast %11 : f32 to vector<2x128xf32>
    %143 = arith.mulf %99, %142 : vector<2x128xf32>
    %144 = arith.addf %141, %143 : vector<2x128xf32>
    %c1_88 = arith.constant 1 : index
    %c2_89 = arith.constant 2 : index
    %c0_90 = arith.constant 0 : index
    %c0_91 = arith.constant 0 : index
    %145 = vector.load %arg5[%c1_88, %c2_89, %c0_90, %c0_91] : memref<2x4x2x128xf32, #tpu.memory_space<vmem>>, vector<1x1x2x128xf32>
    %146 = vector.shape_cast %145 : vector<1x1x2x128xf32> to vector<2x128xf32>
    %147 = vector.shape_cast %144 : vector<2x128xf32> to vector<1x1x2x128xf32>
    tpu.vector_store %arg5[%c1_88, %c2_89, %c0_90, %c0_91], %147 {strides = array<i32>} : memref<2x4x2x128xf32, #tpu.memory_space<vmem>>, vector<1x1x2x128xf32>,
    %148 = vector.broadcast %12 : f32 to vector<2x128xf32>
    %149 = arith.mulf %93, %148 : vector<2x128xf32>
    %150 = vector.broadcast %19 : f32 to vector<2x128xf32>
    %151 = arith.addf %149, %150 : vector<2x128xf32>
    %152 = vector.broadcast %13 : f32 to vector<2x128xf32>
    %153 = arith.mulf %95, %152 : vector<2x128xf32>
    %154 = arith.addf %151, %153 : vector<2x128xf32>
    %155 = vector.broadcast %14 : f32 to vector<2x128xf32>
    %156 = arith.mulf %97, %155 : vector<2x128xf32>
    %157 = arith.addf %154, %156 : vector<2x128xf32>
    %158 = vector.broadcast %15 : f32 to vector<2x128xf32>
    %159 = arith.mulf %99, %158 : vector<2x128xf32>
    %160 = arith.addf %157, %159 : vector<2x128xf32>
    %c1_92 = arith.constant 1 : index
    %c3_93 = arith.constant 3 : index
    %c0_94 = arith.constant 0 : index
    %c0_95 = arith.constant 0 : index
    %161 = vector.load %arg5[%c1_92, %c3_93, %c0_94, %c0_95] : memref<2x4x2x128xf32, #tpu.memory_space<vmem>>, vector<1x1x2x128xf32>
    %162 = vector.shape_cast %161 : vector<1x1x2x128xf32> to vector<2x128xf32>
    %163 = vector.shape_cast %160 : vector<2x128xf32> to vector<1x1x2x128xf32>
    tpu.vector_store %arg5[%c1_92, %c3_93, %c0_94, %c0_95], %163 {strides = array<i32>} : memref<2x4x2x128xf32, #tpu.memory_space<vmem>>, vector<1x1x2x128xf32>,
    return
  }
  func.func @transform_0(%arg0: i32, %arg1: i32) -> (i32, i32) {
    %c0_i32 = arith.constant 0 : i32
    %c0_i32_0 = arith.constant 0 : i32
    %c0_i32_1 = arith.constant 0 : i32
    return %c0_i32, %c0_i32_0 : i32, i32
  }
  func.func @transform_1(%arg0: i32, %arg1: i32) -> i32 {
    %c0_i32 = arith.constant 0 : i32
    %c0_i32_0 = arith.constant 0 : i32
    return %c0_i32 : i32
  }
  func.func @transform_2(%arg0: i32, %arg1: i32) -> (i32, i32, i32, i32) {
    %c0_i32 = arith.constant 0 : i32
    %c0_i32_0 = arith.constant 0 : i32
    %c0_i32_1 = arith.constant 0 : i32
    return %arg0, %c0_i32, %arg1, %c0_i32_0 : i32, i32, i32, i32
  }
  func.func @transform_3(%arg0: i32, %arg1: i32) -> (i32, i32, i32, i32) {
    %c0_i32 = arith.constant 0 : i32
    %c0_i32_0 = arith.constant 0 : i32
    %c0_i32_1 = arith.constant 0 : i32
    return %arg0, %c0_i32, %arg1, %c0_i32_0 : i32, i32, i32, i32
  }
}

</mosaic_0001>

<llo_original>
// kernel: tpu_custom_call.1
$region0: #{tpu_custom_call.1}
  #allocation0 [shape = 'u32[]', space=smem, size = 0x4, offset = 0x4, fixed_abs, tag = 'smem constant byte address 0x4 - core index']
  #allocation1 [shape = 'u32[72,128]{1,0:T(1,128)}', space=vmem, size = 0x9000, scoped, tag = 'internal scratch']
  %s0 = inlined_call_operand.hbm [shape: f32[4,4], index: 0, kind: input, shape index: {}]
  %s1 = inlined_call_operand.hbm [shape: f32[4], index: 1, kind: input, shape index: {}]
  %s2 = inlined_call_operand.hbm [shape: f32[2,4,2,128], index: 2, kind: input, shape index: {}]
  %s3 = inlined_call_operand.hbm [shape: f32[2,4,2,128], index: 3, kind: output, shape index: {}]
  %s4 = sld [smem:[#allocation0]]
  $region34: #{tpu_custom_call.1} parent=0
    _
  %s6 = ssub.s32 1, %s4
  %s7 = scalar_select 0, %s6, %s4
  $region1: #{tpu_custom_call.1} parent=0
    #allocation2 [shape = 'u8[2048]{0}', space=smem, size = 0x800, scoped, tag = 'input window, operand 0, single buffered']
    #allocation3 [shape = 's32[1]{0}', space=sflag, size = 0x4, scoped, tag = 'scoped memory for tpu_custom_call.1']
    #allocation4 [shape = 's32[1]{0}', space=sflag, size = 0x4, scoped, tag = 'scoped memory for tpu_custom_call.1']
    #allocation5 [shape = 's32[1]{0}', space=sflag, size = 0x4, scoped, tag = 'scoped memory for tpu_custom_call.1']
    #allocation6 [shape = 'u8[512]{0}', space=smem, size = 0x200, scoped, tag = 'input window, operand 1, single buffered']
    #allocation7 [shape = 's32[1]{0}', space=sflag, size = 0x4, scoped, tag = 'scoped memory for tpu_custom_call.1']
    #allocation8 [shape = 'u8[8192]{0}', space=vmem, size = 0x2000, scoped, tag = 'input window, operand 2, single buffered']
    #allocation9 [shape = 'u8[8192]{0}', space=vmem, size = 0x2000, scoped, tag = 'output window, operand 0, single buffered']
    %8 = vsyncpa [#allocation5], 0
    %9 = vsyncpa [#allocation7], 0
    %10 = vsyncpa [#allocation3], 0
    %11 = vsyncpa [#allocation4], 0
    // Predicated region
    $region2: #{tpu_custom_call.1} parent=1 // pred_check
      _
    $region3: #{tpu_custom_call.1} parent=1 // pred_check_branch
      %13 = sbr.rel (0) target = $region5
    $region4: #{tpu_custom_call.1} parent=1 // pred_region
      %15 = vsyncadd [#allocation5], 0
      %s17 = sshll.u32 %s0, 4
      %s18 = int_to_ptr.hbm [resolvable:$true] %s17
      %20 = dma.hbm_to_smem %s18, 64, [#allocation2], [#allocation5]
    $region5: #{tpu_custom_call.1} parent=1 // pred_fallthru
      _
    // Predicated region
    $region6: #{tpu_custom_call.1} parent=1 // pred_check
      _
    $region7: #{tpu_custom_call.1} parent=1 // pred_check_branch
      %22 = sbr.rel (0) target = $region9
    $region8: #{tpu_custom_call.1} parent=1 // pred_region
      %24 = vsyncadd [#allocation7], 0
      %s26 = sshll.u32 %s1, 4
      %s27 = int_to_ptr.hbm [resolvable:$true] %s26
      %29 = dma.hbm_to_smem %s27, 16, [#allocation6], [#allocation7]
    $region9: #{tpu_custom_call.1} parent=1 // pred_fallthru
      _
    // Predicated region
    $region10: #{tpu_custom_call.1} parent=1 // pred_check
      _
    $region11: #{tpu_custom_call.1} parent=1 // pred_check_branch
      %31 = sbr.rel (0) target = $region13
    $region12: #{tpu_custom_call.1} parent=1 // pred_region
      %33 = vsyncadd [#allocation3], 0
      %s34 = sshll.u32 %s2, 4
      %s35 = int_to_ptr.hbm [resolvable:$true] %s34
      %s36 = sshll.u32 [#allocation8], 4
      %s37 = int_to_ptr.vmem [resolvable:$true] %s36
      %42 = dma.hbm_to_vmem [thread:$0]  %s35, 256, %s37, [#allocation3], 32, 32, 2
    $region13: #{tpu_custom_call.1} parent=1 // pred_fallthru
      _
    // Predicated region
    $region14: #{tpu_custom_call.1} parent=1 // pred_check
      _
    $region15: #{tpu_custom_call.1} parent=1 // pred_check_branch
      %44 = sbr.rel (0) target = $region17
    $region16: #{tpu_custom_call.1} parent=1 // pred_region
      %46 = dma.done [#allocation5], 64
    $region17: #{tpu_custom_call.1} parent=1 // pred_fallthru
      _
    // Predicated region
    $region18: #{tpu_custom_call.1} parent=1 // pred_check
      _
    $region19: #{tpu_custom_call.1} parent=1 // pred_check_branch
      %48 = sbr.rel (0) target = $region21
    $region20: #{tpu_custom_call.1} parent=1 // pred_region
      %50 = dma.done [#allocation7], 16
    $region21: #{tpu_custom_call.1} parent=1 // pred_fallthru
      _
    // Predicated region
    $region22: #{tpu_custom_call.1} parent=1 // pred_check
      _
    $region23: #{tpu_custom_call.1} parent=1 // pred_check_branch
      %52 = sbr.rel (0) target = $region25
    $region24: #{tpu_custom_call.1} parent=1 // pred_region
      %54 = dma.done [#allocation3], 256
    $region25: #{tpu_custom_call.1} parent=1 // pred_fallthru
      _
    %55 = sfence
    %s56 = sld [smem:[#allocation2]]
    %s57 = sld [smem:[#allocation2 + $0x1]]
    %s58 = sld [smem:[#allocation2 + $0x2]]
    %s59 = sld [smem:[#allocation2 + $0x3]]
    %s60 = sld [smem:[#allocation2 + $0x80]]
    %s61 = sld [smem:[#allocation2 + $0x81]]
    %s62 = sld [smem:[#allocation2 + $0x82]]
    %s63 = sld [smem:[#allocation2 + $0x83]]
    %s64 = sld [smem:[#allocation2 + $0x100]]
    %s65 = sld [smem:[#allocation2 + $0x101]]
    %s66 = sld [smem:[#allocation2 + $0x102]]
    %s67 = sld [smem:[#allocation2 + $0x103]]
    %s68 = sld [smem:[#allocation2 + $0x180]]
    %s69 = sld [smem:[#allocation2 + $0x181]]
    %s70 = sld [smem:[#allocation2 + $0x182]]
    %s71 = sld [smem:[#allocation2 + $0x183]]
    %s72 = sld [smem:[#allocation6]]
    %s73 = sld [smem:[#allocation6 + $0x1]]
    %s74 = sld [smem:[#allocation6 + $0x2]]
    %s75 = sld [smem:[#allocation6 + $0x3]]
    %v76 = vld [vmem:[#allocation8] sm:$0x3]
    %s77 = scalar_lea.vmem [#allocation8], 2
    %v78 = vld [vmem:[%s77] sm:$0x3]
    %s79 = scalar_lea.vmem [#allocation8], 4
    %v80 = vld [vmem:[%s79] sm:$0x3]
    %s81 = scalar_lea.vmem [#allocation8], 6
    %v82 = vld [vmem:[%s81] sm:$0x3]
    %v83 = vstv %s56
    %v84 = vmul.f32 %v76, %v83
    %v85 = vstv %s72
    %v86 = vadd.f32 %v84, %v85
    %v87 = vstv %s57
    %v88 = vmul.f32 %v78, %v87
    %v89 = vadd.f32 %v86, %v88
    %v90 = vstv %s58
    %v91 = vmul.f32 %v80, %v90
    %v92 = vadd.f32 %v89, %v91
    %v93 = vstv %s59
    %v94 = vmul.f32 %v82, %v93
    %v95 = vadd.f32 %v92, %v94
    %96 = vst [vmem:[#allocation9] sm:$0x3] %v95
    %v97 = vstv %s60
    %v98 = vmul.f32 %v76, %v97
    %v99 = vstv %s73
    %v100 = vadd.f32 %v98, %v99
    %v101 = vstv %s61
    %v102 = vmul.f32 %v78, %v101
    %v103 = vadd.f32 %v100, %v102
    %v104 = vstv %s62
    %v105 = vmul.f32 %v80, %v104
    %v106 = vadd.f32 %v103, %v105
    %v107 = vstv %s63
    %v108 = vmul.f32 %v82, %v107
    %v109 = vadd.f32 %v106, %v108
    %s110 = scalar_lea.vmem [#allocation9], 2
    %111 = vst [vmem:[%s110] sm:$0x3] %v109
    %v112 = vstv %s64
    %v113 = vmul.f32 %v76, %v112
    %v114 = vstv %s74
    %v115 = vadd.f32 %v113, %v114
    %v116 = vstv %s65
    %v117 = vmul.f32 %v78, %v116
    %v118 = vadd.f32 %v115, %v117
    %v119 = vstv %s66
    %v120 = vmul.f32 %v80, %v119
    %v121 = vadd.f32 %v118, %v120
    %v122 = vstv %s67
    %v123 = vmul.f32 %v82, %v122
    %v124 = vadd.f32 %v121, %v123
    %s125 = scalar_lea.vmem [#allocation9], 4
    %126 = vst [vmem:[%s125] sm:$0x3] %v124
    %v127 = vstv %s68
    %v128 = vmul.f32 %v76, %v127
    %v129 = vstv %s75
    %v130 = vadd.f32 %v128, %v129
    %v131 = vstv %s69
    %v132 = vmul.f32 %v78, %v131
    %v133 = vadd.f32 %v130, %v132
    %v134 = vstv %s70
    %v135 = vmul.f32 %v80, %v134
    %v136 = vadd.f32 %v133, %v135
    %v137 = vstv %s71
    %v138 = vmul.f32 %v82, %v137
    %v139 = vadd.f32 %v136, %v138
    %s140 = scalar_lea.vmem [#allocation9], 6
    %141 = vst [vmem:[%s140] sm:$0x3] %v139
    %s142 = scalar_lea.vmem [#allocation8], 8
    %v143 = vld [vmem:[%s142] sm:$0x3]
    %s144 = scalar_lea.vmem [#allocation8], 10
    %v145 = vld [vmem:[%s144] sm:$0x3]
    %s146 = scalar_lea.vmem [#allocation8], 12
    %v147 = vld [vmem:[%s146] sm:$0x3]
    %s148 = scalar_lea.vmem [#allocation8], 14
    %v149 = vld [vmem:[%s148] sm:$0x3]
    %v150 = vmul.f32 %v143, %v83
    %v151 = vadd.f32 %v150, %v85
    %v152 = vmul.f32 %v145, %v87
    %v153 = vadd.f32 %v151, %v152
    %v154 = vmul.f32 %v147, %v90
    %v155 = vadd.f32 %v153, %v154
    %v156 = vmul.f32 %v149, %v93
    %v157 = vadd.f32 %v155, %v156
    %s158 = scalar_lea.vmem [#allocation9], 8
    %159 = vst [vmem:[%s158] sm:$0x3] %v157
    %v160 = vmul.f32 %v143, %v97
    %v161 = vadd.f32 %v160, %v99
    %v162 = vmul.f32 %v145, %v101
    %v163 = vadd.f32 %v161, %v162
    %v164 = vmul.f32 %v147, %v104
    %v165 = vadd.f32 %v163, %v164
    %v166 = vmul.f32 %v149, %v107
    %v167 = vadd.f32 %v165, %v166
    %s168 = scalar_lea.vmem [#allocation9], 10
    %169 = vst [vmem:[%s168] sm:$0x3] %v167
    %v170 = vmul.f32 %v143, %v112
    %v171 = vadd.f32 %v170, %v114
    %v172 = vmul.f32 %v145, %v116
    %v173 = vadd.f32 %v171, %v172
    %v174 = vmul.f32 %v147, %v119
    %v175 = vadd.f32 %v173, %v174
    %v176 = vmul.f32 %v149, %v122
    %v177 = vadd.f32 %v175, %v176
    %s178 = scalar_lea.vmem [#allocation9], 12
    %179 = vst [vmem:[%s178] sm:$0x3] %v177
    %v180 = vmul.f32 %v143, %v127
    %v181 = vadd.f32 %v180, %v129
    %v182 = vmul.f32 %v145, %v131
    %v183 = vadd.f32 %v181, %v182
    %v184 = vmul.f32 %v147, %v134
    %v185 = vadd.f32 %v183, %v184
    %v186 = vmul.f32 %v149, %v137
    %v187 = vadd.f32 %v185, %v186
    %s188 = scalar_lea.vmem [#allocation9], 14
    %189 = vst [vmem:[%s188] sm:$0x3] %v187
    // Predicated region
    $region26: #{tpu_custom_call.1} parent=1 // pred_check
      _
    $region27: #{tpu_custom_call.1} parent=1 // pred_check_branch
      %191 = sbr.rel (0) target = $region29
    $region28: #{tpu_custom_call.1} parent=1 // pred_region
      %193 = vsyncadd [#allocation4], 0
      %s194 = sshll.u32 [#allocation9], 4
      %s195 = int_to_ptr.vmem [resolvable:$true] %s194
      %s196 = sshll.u32 %s3, 4
      %s197 = int_to_ptr.hbm [resolvable:$true] %s196
      %202 = dma.vmem_to_hbm [thread:$0]  %s195, 256, %s197, [#allocation4], 32, 32, 2
    $region29: #{tpu_custom_call.1} parent=1 // pred_fallthru
      _
    // Predicated region
    $region30: #{tpu_custom_call.1} parent=1 // pred_check
      _
    $region31: #{tpu_custom_call.1} parent=1 // pred_check_branch
      %204 = sbr.rel (0) target = $region33
    $region32: #{tpu_custom_call.1} parent=1 // pred_region
      %206 = dma.done [#allocation4], 256
    $region33: #{tpu_custom_call.1} parent=1 // pred_fallthru
      _
    %207 = vsyncpa [#allocation3], 1
    %208 = vsyncpa [#allocation4], 1
    %209 = vsyncpa [#allocation5], 1
    %210 = vsyncpa [#allocation7], 1

</llo_original>
